<compile_context>
chip_gen: v5e
topology: v5e:2x2
jax: 0.10.0
libtpu: 0.0.40
codegen_flags: <defaults>
</compile_context>

<pallas_src>
import functools
import math

import jax
import jax.numpy as jnp
import numpy as np
from jax.experimental import pallas as pl
from jax.experimental.pallas import tpu as pltpu


# ----------------------------------------------------------------------------
# Pallas kernel
# ----------------------------------------------------------------------------
def _unit_tcn_kernel(x_ref, w_ref, b_ref, o_ref, *, V, pad):
    """Fused temporal conv (kernel (Kt,1), stride 1) with BN pre-folded into w/b.

    x_ref : (T*V, Cin)        flat channels-last block for one batch sample
    w_ref : (Kt, Cin, Cout)   BN-folded conv weights, tap-major
    b_ref : (1, Cout)         BN-folded bias
    o_ref : (T*V, Cout)
    """
    TV_in, Cin = x_ref.shape
    Kt = w_ref.shape[0]
    TV_out, Cout = o_ref.shape

    x = x_ref[...].astype(jnp.float32)
    if pad > 0:
        # zero halo rows stay in VMEM; sublane-axis concat, sizes multiple of V
        halo = jnp.zeros((pad * V, Cin), jnp.float32)
        xp = jnp.concatenate([halo, x, halo], axis=0)          # ((T+2*pad)*V, Cin)
    else:
        xp = x

    acc = jnp.zeros((TV_out, Cout), jnp.float32)
    for k in range(Kt):                                        # static tap count
        # temporal tap k == sublane row-shift by k*V in the flattened (t, v) index
        xk = xp[k * V:k * V + TV_out, :]                       # (T*V, Cin)
        acc = acc + jnp.dot(xk, w_ref[k], preferred_element_type=jnp.float32)

    o_ref[...] = (acc + b_ref[...]).astype(o_ref.dtype)        # lane-dense store


# ----------------------------------------------------------------------------
# Wrapper
# ----------------------------------------------------------------------------
def unit_tcn_forward(x_nchw, conv_w, conv_b, bn_gamma, bn_beta, bn_mean, bn_var,
                     *, stride=1, eps=1e-5, out_dtype=jnp.float32):
    """Forward of unit_tcn: BatchNorm2d(Conv2d(x, k=(Kt,1), pad=((Kt-1)//2, 0))).

    x_nchw : (N, Cin, T, V) PyTorch layout.   conv_w : (Cout, Cin, Kt, 1).
    Returns (N, Cout, T_out, V).  (No ReLU — the module's forward does not apply it.)
    """
    if stride != 1:
        # TODO(synk): strided temporal conv not implemented.
        raise NotImplementedError("unit_tcn Pallas kernel: stride > 1 not implemented")

    N, Cin, T, V = x_nchw.shape
    Cout, _, Kt, _ = conv_w.shape
    pad = (Kt - 1) // 2
    T_out = T + 2 * pad - Kt + 1

    # Fold inference-mode BatchNorm into conv weight / bias.
    scale = bn_gamma / jnp.sqrt(bn_var + eps)                                  # (Cout,)
    w = jnp.transpose(conv_w[..., 0] * scale[:, None, None], (2, 1, 0))        # (Kt, Cin, Cout)
    w = w.astype(jnp.float32)
    b = ((conv_b - bn_mean) * scale + bn_beta).reshape(1, Cout).astype(jnp.float32)

    # Channels-last, (T, V) flattened onto sublanes: free host-side reshape/transpose.
    x = jnp.transpose(x_nchw, (0, 2, 3, 1)).reshape(N, T * V, Cin)

    kernel = functools.partial(_unit_tcn_kernel, V=V, pad=pad)

    flops = 2 * N * T_out * V * Kt * Cin * Cout
    bytes_accessed = 4 * (x.size + w.size + b.size + N * T_out * V * Cout)

    out = pl.pallas_call(
        kernel,
        out_shape=jax.ShapeDtypeStruct((N, T_out * V, Cout), out_dtype),
        grid_spec=pltpu.PrefetchScalarGridSpec(
            num_scalar_prefetch=0,
            grid=(N,),                                       # batch-parallel
            in_specs=[
                pl.BlockSpec((None, T * V, Cin), lambda n: (n, 0, 0)),
                pl.BlockSpec((Kt, Cin, Cout), lambda n: (0, 0, 0)),
                pl.BlockSpec((1, Cout), lambda n: (0, 0)),
            ],
            out_specs=pl.BlockSpec((None, T_out * V, Cout), lambda n: (n, 0, 0)),
        ),
        compiler_params=pltpu.CompilerParams(
            dimension_semantics=("parallel",),
            vmem_limit_bytes=32 * 1024 * 1024,               # >= v5e 16 MiB scoped default
        ),
        cost_estimate=pl.CostEstimate(flops=flops, transcendentals=0,
                                      bytes_accessed=bytes_accessed),
    )(x, w, b)

    # (N, T_out*V, Cout) -> (N, Cout, T_out, V): back to PyTorch layout (cheap, outside kernel).
    return jnp.transpose(out.reshape(N, T_out, V, Cout), (0, 3, 1, 2))


# ----------------------------------------------------------------------------
# Deterministic parameter init (mirrors conv_init / bn_init in the torch module)
# ----------------------------------------------------------------------------
def init_unit_tcn_params(key, in_channels, out_channels, kernel_size=5):
    # conv_init: kaiming_normal_(weight, mode='fan_out') -> std = sqrt(2 / fan_out),
    # fan_out = out_channels * kernel_size * 1; bias = 0.
    fan_out = out_channels * kernel_size * 1
    std = math.sqrt(2.0 / fan_out)
    conv_w = std * jax.random.normal(
        key, (out_channels, in_channels, kernel_size, 1), jnp.float32)
    conv_b = jnp.zeros((out_channels,), jnp.float32)
    # bn_init(bn, 1): gamma=1, beta=0; fresh running stats: mean=0, var=1 (inference).
    bn_gamma = jnp.ones((out_channels,), jnp.float32)
    bn_beta = jnp.zeros((out_channels,), jnp.float32)
    bn_mean = jnp.zeros((out_channels,), jnp.float32)
    bn_var = jnp.ones((out_channels,), jnp.float32)
    return conv_w, conv_b, bn_gamma, bn_beta, bn_mean, bn_var


# ----------------------------------------------------------------------------
# Pure-JAX reference (mirrors the PyTorch forward, inference-mode BN)
# ----------------------------------------------------------------------------
def reference_forward(x_nchw, conv_w, conv_b, bn_gamma, bn_beta, bn_mean, bn_var,
                      *, eps=1e-5):
    Cout, Cin, Kt, _ = conv_w.shape
    pad = (Kt - 1) // 2
    T = x_nchw.shape[2]
    T_out = T + 2 * pad - Kt + 1
    xp = jnp.pad(x_nchw, ((0, 0), (0, 0), (pad, pad), (0, 0)))
    y = sum(
        jnp.einsum('nctv,oc->notv', xp[:, :, k:k + T_out], conv_w[:, :, k, 0],
                   precision=jax.lax.Precision.HIGHEST)
        for k in range(Kt)
    ) + conv_b[None, :, None, None]
    scale = (bn_gamma / jnp.sqrt(bn_var + eps))[None, :, None, None]
    return (y - bn_mean[None, :, None, None]) * scale + bn_beta[None, :, None, None]


# ----------------------------------------------------------------------------
if __name__ == "__main__":
    key = jax.random.PRNGKey(0)
    k_x, k_w = jax.random.split(key)

    # Small demo shapes; Cout=128 keeps the output store lane-dense (full 128 lanes).
    N, Cin, Cout, T, V, Kt = 2, 4, 128, 16, 16, 5

    x_nchw = jax.random.normal(k_x, (N, Cin, T, V), jnp.float32)   # PyTorch NCHW input
    params = init_unit_tcn_params(k_w, Cin, Cout, kernel_size=Kt)

    y = unit_tcn_forward(x_nchw, *params, stride=1)
    y = jax.block_until_ready(y)

    y_ref = reference_forward(x_nchw, *params)
    assert y.shape == (N, Cout, T, V)
    np.testing.assert_allclose(np.asarray(y), np.asarray(y_ref), rtol=5e-3, atol=5e-3)
    print("KERNEL_OK")
</pallas_src>

<mosaic_0001>
module attributes {stable_mosaic.version = 11 : i64} {
  func.func @_unit_tcn_kernel(%arg0: i32, %arg1: memref<1x256x4xf32, #tpu.memory_space<vmem>>, %arg2: memref<5x4x128xf32, #tpu.memory_space<vmem>>, %arg3: memref<1x128xf32, #tpu.memory_space<vmem>>, %arg4: memref<1x256x128xf32, #tpu.memory_space<vmem>>) attributes {dimension_semantics = [#tpu.dimension_semantics<parallel>], iteration_bounds = array<i64: 2>, scalar_prefetch = 0 : i64, scratch_operands = 0 : i64, tpu.core_type = #tpu.core_type<tc>, window_params = [{transform_indices = @transform_0, window_bounds = array<i64: 1, 256, 4>}, {pipeline_mode = #tpu.pipeline_mode<synchronous>, transform_indices = @transform_1, window_bounds = array<i64: 5, 4, 128>}, {pipeline_mode = #tpu.pipeline_mode<synchronous>, transform_indices = @transform_2, window_bounds = array<i64: 1, 128>}, {transform_indices = @transform_3, window_bounds = array<i64: 1, 256, 128>}]} {
    %c0 = arith.constant 0 : index
    %c0_0 = arith.constant 0 : index
    %c0_1 = arith.constant 0 : index
    %0 = vector.load %arg1[%c0, %c0_0, %c0_1] : memref<1x256x4xf32, #tpu.memory_space<vmem>>, vector<1x256x4xf32>
    %1 = vector.shape_cast %0 : vector<1x256x4xf32> to vector<256x4xf32>
    %cst = arith.constant 0.000000e+00 : f32
    %2 = vector.broadcast %cst : f32 to vector<32x4xf32>
    %3 = tpu.concatenate %2, %1, %2 in 0 : vector<32x4xf32>, vector<256x4xf32>, vector<32x4xf32> -> vector<320x4xf32>
    %cst_2 = arith.constant 0.000000e+00 : f32
    %4 = vector.broadcast %cst_2 : f32 to vector<256x128xf32>
    %5 = vector.extract_strided_slice %3 {offsets = [0, 0], sizes = [256, 4], strides = [1, 1]} : vector<320x4xf32> to vector<256x4xf32>
    %c0_3 = arith.constant 0 : index
    %c0_4 = arith.constant 0 : index
    %c0_5 = arith.constant 0 : index
    %6 = vector.load %arg2[%c0_3, %c0_4, %c0_5] : memref<5x4x128xf32, #tpu.memory_space<vmem>>, vector<1x4x128xf32>
    %7 = vector.shape_cast %6 : vector<1x4x128xf32> to vector<4x128xf32>
    %cst_6 = arith.constant dense<0.000000e+00> : vector<256x128xf32>
    %8 = tpu.matmul %5, %7, %cst_6 {dimension_numbers = #tpu.dot_dimension_numbers<[1], [0], [0], [1], [0, 0, 1, 1], [], []>} : vector<256x4xf32>, vector<4x128xf32>, vector<256x128xf32> -> vector<256x128xf32>
    %9 = arith.addf %4, %8 : vector<256x128xf32>
    %10 = vector.extract_strided_slice %3 {offsets = [16, 0], sizes = [256, 4], strides = [1, 1]} : vector<320x4xf32> to vector<256x4xf32>
    %c1 = arith.constant 1 : index
    %c0_7 = arith.constant 0 : index
    %c0_8 = arith.constant 0 : index
    %11 = vector.load %arg2[%c1, %c0_7, %c0_8] : memref<5x4x128xf32, #tpu.memory_space<vmem>>, vector<1x4x128xf32>
    %12 = vector.shape_cast %11 : vector<1x4x128xf32> to vector<4x128xf32>
    %cst_9 = arith.constant dense<0.000000e+00> : vector<256x128xf32>
    %13 = tpu.matmul %10, %12, %cst_9 {dimension_numbers = #tpu.dot_dimension_numbers<[1], [0], [0], [1], [0, 0, 1, 1], [], []>} : vector<256x4xf32>, vector<4x128xf32>, vector<256x128xf32> -> vector<256x128xf32>
    %14 = arith.addf %9, %13 : vector<256x128xf32>
    %15 = vector.extract_strided_slice %3 {offsets = [32, 0], sizes = [256, 4], strides = [1, 1]} : vector<320x4xf32> to vector<256x4xf32>
    %c2 = arith.constant 2 : index
    %c0_10 = arith.constant 0 : index
    %c0_11 = arith.constant 0 : index
    %16 = vector.load %arg2[%c2, %c0_10, %c0_11] : memref<5x4x128xf32, #tpu.memory_space<vmem>>, vector<1x4x128xf32>
    %17 = vector.shape_cast %16 : vector<1x4x128xf32> to vector<4x128xf32>
    %cst_12 = arith.constant dense<0.000000e+00> : vector<256x128xf32>
    %18 = tpu.matmul %15, %17, %cst_12 {dimension_numbers = #tpu.dot_dimension_numbers<[1], [0], [0], [1], [0, 0, 1, 1], [], []>} : vector<256x4xf32>, vector<4x128xf32>, vector<256x128xf32> -> vector<256x128xf32>
    %19 = arith.addf %14, %18 : vector<256x128xf32>
    %20 = vector.extract_strided_slice %3 {offsets = [48, 0], sizes = [256, 4], strides = [1, 1]} : vector<320x4xf32> to vector<256x4xf32>
    %c3 = arith.constant 3 : index
    %c0_13 = arith.constant 0 : index
    %c0_14 = arith.constant 0 : index
    %21 = vector.load %arg2[%c3, %c0_13, %c0_14] : memref<5x4x128xf32, #tpu.memory_space<vmem>>, vector<1x4x128xf32>
    %22 = vector.shape_cast %21 : vector<1x4x128xf32> to vector<4x128xf32>
    %cst_15 = arith.constant dense<0.000000e+00> : vector<256x128xf32>
    %23 = tpu.matmul %20, %22, %cst_15 {dimension_numbers = #tpu.dot_dimension_numbers<[1], [0], [0], [1], [0, 0, 1, 1], [], []>} : vector<256x4xf32>, vector<4x128xf32>, vector<256x128xf32> -> vector<256x128xf32>
    %24 = arith.addf %19, %23 : vector<256x128xf32>
    %25 = vector.extract_strided_slice %3 {offsets = [64, 0], sizes = [256, 4], strides = [1, 1]} : vector<320x4xf32> to vector<256x4xf32>
    %c4 = arith.constant 4 : index
    %c0_16 = arith.constant 0 : index
    %c0_17 = arith.constant 0 : index
    %26 = vector.load %arg2[%c4, %c0_16, %c0_17] : memref<5x4x128xf32, #tpu.memory_space<vmem>>, vector<1x4x128xf32>
    %27 = vector.shape_cast %26 : vector<1x4x128xf32> to vector<4x128xf32>
    %cst_18 = arith.constant dense<0.000000e+00> : vector<256x128xf32>
    %28 = tpu.matmul %25, %27, %cst_18 {dimension_numbers = #tpu.dot_dimension_numbers<[1], [0], [0], [1], [0, 0, 1, 1], [], []>} : vector<256x4xf32>, vector<4x128xf32>, vector<256x128xf32> -> vector<256x128xf32>
    %29 = arith.addf %24, %28 : vector<256x128xf32>
    %c0_19 = arith.constant 0 : index
    %c0_20 = arith.constant 0 : index
    %30 = vector.load %arg3[%c0_19, %c0_20] : memref<1x128xf32, #tpu.memory_space<vmem>>, vector<1x128xf32>
    %31 = vector.broadcast %30 : vector<1x128xf32> to vector<256x128xf32>
    %32 = arith.addf %29, %31 : vector<256x128xf32>
    %c0_21 = arith.constant 0 : index
    %c0_22 = arith.constant 0 : index
    %c0_23 = arith.constant 0 : index
    %33 = vector.load %arg4[%c0_21, %c0_22, %c0_23] : memref<1x256x128xf32, #tpu.memory_space<vmem>>, vector<1x256x128xf32>
    %34 = vector.shape_cast %33 : vector<1x256x128xf32> to vector<256x128xf32>
    %35 = vector.shape_cast %32 : vector<256x128xf32> to vector<1x256x128xf32>
    tpu.vector_store %arg4[%c0_21, %c0_22, %c0_23], %35 {strides = array<i32>} : memref<1x256x128xf32, #tpu.memory_space<vmem>>, vector<1x256x128xf32>,
    return
  }
  func.func @transform_0(%arg0: i32) -> (i32, i32, i32) {
    %c0_i32 = arith.constant 0 : i32
    %c0_i32_0 = arith.constant 0 : i32
    %c0_i32_1 = arith.constant 0 : i32
    return %arg0, %c0_i32, %c0_i32_0 : i32, i32, i32
  }
  func.func @transform_1(%arg0: i32) -> (i32, i32, i32) {
    %c0_i32 = arith.constant 0 : i32
    %c0_i32_0 = arith.constant 0 : i32
    %c0_i32_1 = arith.constant 0 : i32
    %c0_i32_2 = arith.constant 0 : i32
    return %c0_i32, %c0_i32_0, %c0_i32_1 : i32, i32, i32
  }
  func.func @transform_2(%arg0: i32) -> (i32, i32) {
    %c0_i32 = arith.constant 0 : i32
    %c0_i32_0 = arith.constant 0 : i32
    %c0_i32_1 = arith.constant 0 : i32
    return %c0_i32, %c0_i32_0 : i32, i32
  }
  func.func @transform_3(%arg0: i32) -> (i32, i32, i32) {
    %c0_i32 = arith.constant 0 : i32
    %c0_i32_0 = arith.constant 0 : i32
    %c0_i32_1 = arith.constant 0 : i32
    return %arg0, %c0_i32, %c0_i32_0 : i32, i32, i32
  }
}

</mosaic_0001>

<llo_original>
// kernel: tpu_custom_call.1
$region0: #{tpu_custom_call.1}
  #allocation0 [shape = 'u32[]', space=smem, size = 0x4, offset = 0x4, fixed_abs, tag = 'smem constant byte address 0x4 - core index']
  #allocation1 [shape = 'u32[72,128]{1,0:T(1,128)}', space=vmem, size = 0x9000, scoped, tag = 'internal scratch']
  %s0 = inlined_call_operand.vmem [shape: f32[2,256,4], index: 0, kind: input, shape index: {}]
  %s1 = inlined_call_operand.vmem [shape: f32[5,4,128], index: 1, kind: input, shape index: {}]
  %s2 = inlined_call_operand.vmem [shape: f32[1,128], index: 2, kind: input, shape index: {}]
  %s3 = inlined_call_operand.hbm [shape: f32[2,256,128], index: 3, kind: output, shape index: {}]
  %s4 = sld [smem:[#allocation0]]
  $region45: #{tpu_custom_call.1} parent=0
    _
  %s6 = ssub.s32 1, %s4
  %s7 = scalar_select 0, %s6, %s4
  $region1: #{tpu_custom_call.1} parent=0
    #allocation2 [shape = 'u8[262144]{0}', space=vmem, size = 0x40000, scoped, tag = 'output window, operand 0']
    #allocation3 [shape = 's32[2]{0}', space=sflag, size = 0x8, scoped, tag = 'scoped memory for tpu_custom_call.1']
    %8 = vsyncpa [#allocation3], 0
    %s9 = scalar_lea.sflag [#allocation3], 1
    %10 = vsyncpa %s9, 0
    loop: start=0, step=1, limit=4
    $region2: #{tpu_custom_call.1} parent=1 // loop_pre_header
      _
    $region3: #{tpu_custom_call.1} parent=1 // loop_header
      %s12 = sphi 0, %s16
      %p13 = scmp.ge.s32.totalorder %s12, 4
      %s22 = sphi 0, %s24
      %s25 = sphi 0, %s22
      %s26 = sphi 0, %s25
      %s42 = sphi 0, %s26
      %s46 = sphi 0, %s46
      %s48 = sphi 0, %s46
      %s49 = sphi 0, %s48
      %s63 = sphi 0, %s49
      %s67 = sphi 0, %s67
      %s69 = sphi 0, %s67
      %s70 = sphi 0, %s69
      %s84 = sphi 0, %s70
      %s90 = sphi 0, %s92
      %s93 = sphi 0, %s90
      %s94 = sphi 0, %s93
      %s110 = sphi 0, %s94
    $region4: #{tpu_custom_call.1} parent=1 // loop_header_branch
      %15 = sbr.rel (%p13) target = $region8
    $region5: #{tpu_custom_call.1} parent=1 // loop_body
      %s17 = ssub.s32 %s12, 1
      %s18 = ssub.s32 %s12, 2
      %s19 = sadd.s32 %s12, 1
      %s20 = ssub.s32 %s12, %s19
      %p21 = scmp.eq.s32.totalorder %s20, 0
      %s23 = sadd.s32 %s22, 1
      %s24 = scalar_select %p21, %s22, %s23
      %p27 = pneg %p21
      %p28 = scmp.eq.s32.totalorder %s12, 1
      %p29 = por %p27, %p28
      %p30 = scmp.ne.s32.totalorder %s22, %s25
      %p31 = scmp.eq.s32.totalorder %s12, 0
      %p32 = por %p30, %p31
      %p33 = scmp.ne.s32.totalorder %s22, %s25
      %p34 = scmp.eq.s32.totalorder %s17, 1
      %p35 = por %p33, %p34
      %p36 = scmp.ne.s32.totalorder %s25, %s26
      %p37 = scmp.eq.s32.totalorder %s17, 0
      %p38 = por %p36, %p37
      %p39 = scmp.ne.s32.totalorder %s25, %s26
      %p40 = scmp.eq.s32.totalorder %s18, 1
      %p41 = por %p39, %p40
      %p43 = scmp.ne.s32.totalorder %s26, %s42
      %p44 = scmp.eq.s32.totalorder %s18, 0
      %p45 = por %p43, %p44
      %s47 = sadd.s32 %s46, 1
      %p50 = scmp.eq.s32.totalorder %s12, 1
      %p51 = scmp.ne.s32.totalorder %s46, %s48
      %p52 = scmp.eq.s32.totalorder %s12, 0
      %p53 = por %p51, %p52
      %p54 = scmp.ne.s32.totalorder %s46, %s48
      %p55 = scmp.eq.s32.totalorder %s17, 1
      %p56 = por %p54, %p55
      %p57 = scmp.ne.s32.totalorder %s48, %s49
      %p58 = scmp.eq.s32.totalorder %s17, 0
      %p59 = por %p57, %p58
      %p60 = scmp.ne.s32.totalorder %s48, %s49
      %p61 = scmp.eq.s32.totalorder %s18, 1
      %p62 = por %p60, %p61
      %p64 = scmp.ne.s32.totalorder %s49, %s63
      %p65 = scmp.eq.s32.totalorder %s18, 0
      %p66 = por %p64, %p65
      %s68 = sadd.s32 %s67, 1
      %p71 = scmp.eq.s32.totalorder %s12, 1
      %p72 = scmp.ne.s32.totalorder %s67, %s69
      %p73 = scmp.eq.s32.totalorder %s12, 0
      %p74 = por %p72, %p73
      %p75 = scmp.ne.s32.totalorder %s67, %s69
      %p76 = scmp.eq.s32.totalorder %s17, 1
      %p77 = por %p75, %p76
      %p78 = scmp.ne.s32.totalorder %s69, %s70
      %p79 = scmp.eq.s32.totalorder %s17, 0
      %p80 = por %p78, %p79
      %p81 = scmp.ne.s32.totalorder %s69, %s70
      %p82 = scmp.eq.s32.totalorder %s18, 1
      %p83 = por %p81, %p82
      %p85 = scmp.ne.s32.totalorder %s70, %s84
      %p86 = scmp.eq.s32.totalorder %s18, 0
      %p87 = por %p85, %p86
      %s88 = ssub.s32 %s12, %s19
      %p89 = scmp.eq.s32.totalorder %s88, 0
      %s91 = sadd.s32 %s90, 1
      %s92 = scalar_select %p89, %s90, %s91
      %p95 = pneg %p89
      %p96 = scmp.eq.s32.totalorder %s12, 1
      %p97 = por %p95, %p96
      %p98 = scmp.ne.s32.totalorder %s90, %s93
      %p99 = scmp.eq.s32.totalorder %s12, 0
      %p100 = por %p98, %p99
      %p101 = scmp.ne.s32.totalorder %s90, %s93
      %p102 = scmp.eq.s32.totalorder %s17, 1
      %p103 = por %p101, %p102
      %p104 = scmp.ne.s32.totalorder %s93, %s94
      %p105 = scmp.eq.s32.totalorder %s17, 0
      %p106 = por %p104, %p105
      %p107 = scmp.ne.s32.totalorder %s93, %s94
      %p108 = scmp.eq.s32.totalorder %s18, 1
      %p109 = por %p107, %p108
      %p111 = scmp.ne.s32.totalorder %s94, %s110
      %p112 = scmp.eq.s32.totalorder %s18, 0
      %p113 = por %p111, %p112
      %p114 = scmp.le.s32.totalorder 1, %s12
      %p115 = scmp.lt.s32.totalorder %s12, 3
      %p116 = pnand %p114, %p115
      %p117 = pneg %p116
      // Predicated region
      $region9: #{tpu_custom_call.1} parent=5 // pred_check
        _
      $region10: #{tpu_custom_call.1} parent=5 // pred_check_branch
        %119 = sbr.rel (%p116) target = $region12
      $region11: #{tpu_custom_call.1} parent=5 // pred_region
        %s120 = ssub.s32 %s12, 1
        // Predicated region
        $region13: #{tpu_custom_call.1} parent=11 // pred_check
          %p121 = pneg %p59
        $region14: #{tpu_custom_call.1} parent=11 // pred_check_branch
          %123 = sbr.rel (%p121) target = $region16
        $region15: #{tpu_custom_call.1} parent=11 // pred_region
          _
        $region16: #{tpu_custom_call.1} parent=11 // pred_fallthru
          _
        // Predicated region
        $region17: #{tpu_custom_call.1} parent=11 // pred_check
          %p124 = pneg %p80
        $region18: #{tpu_custom_call.1} parent=11 // pred_check_branch
          %126 = sbr.rel (%p124) target = $region20
        $region19: #{tpu_custom_call.1} parent=11 // pred_region
          _
        $region20: #{tpu_custom_call.1} parent=11 // pred_fallthru
          _
      $region12: #{tpu_custom_call.1} parent=5 // pred_fallthru
        _
      %p127 = scmp.lt.s32.totalorder %s12, 2
      // Predicated region
      $region21: #{tpu_custom_call.1} parent=5 // pred_check
        %p128 = pneg %p127
      $region22: #{tpu_custom_call.1} parent=5 // pred_check_branch
        %130 = sbr.rel (%p128) target = $region24
      $region23: #{tpu_custom_call.1} parent=5 // pred_region
        // Predicated region
        $region25: #{tpu_custom_call.1} parent=23 // pred_check
          %p131 = pneg %p32
        $region26: #{tpu_custom_call.1} parent=23 // pred_check_branch
          %133 = sbr.rel (%p131) target = $region28
        $region27: #{tpu_custom_call.1} parent=23 // pred_region
          %p134 = scmp.lt.s32.totalorder %s12, 1
          %s135 = scalar_select %p134, %s12, 1
          %s136 = smul.addr %s135, 32
          %s137 = smul.addr %s136, 8
          %s138 = scalar_lea.vmem %s0, %s137
        $region28: #{tpu_custom_call.1} parent=23 // pred_fallthru
          _
      $region24: #{tpu_custom_call.1} parent=5 // pred_fallthru
        _
      %p139 = scmp.le.s32.totalorder 1, %s12
      %p140 = scmp.lt.s32.totalorder %s12, 3
      %p141 = pnand %p139, %p140
      %p142 = pneg %p141
      // Predicated region
      $region29: #{tpu_custom_call.1} parent=5 // pred_check
        _
      $region30: #{tpu_custom_call.1} parent=5 // pred_check_branch
        %144 = sbr.rel (%p141) target = $region32
      $region31: #{tpu_custom_call.1} parent=5 // pred_region
        %s145 = ssub.s32 %s12, 1
        %p146 = scmp.lt.s32.totalorder %s17, 1
        %s147 = scalar_select %p146, %s17, 1
        %s148 = smul.addr %s147, 32
        %s149 = smul.addr %s148, 8
        %s150 = scalar_lea.vmem %s0, %s149
        %p151 = pneg %p38
        %p152 = pneg %p35
        %p153 = pneg %p59
        %p154 = pneg %p56
        %p155 = pneg %p80
        %p156 = pneg %p77
        %p157 = pneg %p106
        %p158 = pneg %p103
        %s159 = sand.u32 %s93, 1
        %s160 = scalar_lea.sflag [#allocation3], %s159
        %s161 = sand.u32 %s93, 1
        %s162 = smul.addr %s161, 256
        %s163 = scalar_lea.vmem [#allocation2], %s162
        %p164 = scmp.lt.s32.totalorder %s17, 1
        %s165 = scalar_select %p164, %s17, 1
        %s166 = smul.addr %s165, 32
        %s167 = smul.addr %s166, 8
        %s168 = scalar_lea.vmem %s0, %s167
        %v169 = vld [vmem:[%s168] sm:$0xff]
        %v170 = vld [vmem:[%s168 + $0x8] sm:$0xff]
        %v171 = vld [vmem:[%s168 + $0x10] sm:$0xff]
        %v172 = vld [vmem:[%s168 + $0x18] sm:$0xff]
        %v173 = vld [vmem:[%s168 + $0x20] sm:$0xff]
        %v174 = vld [vmem:[%s168 + $0x28] sm:$0xff]
        %v175 = vld [vmem:[%s168 + $0x30] sm:$0xff]
        %v176 = vld [vmem:[%s168 + $0x38] sm:$0xff]
        %v177 = vld [vmem:[%s168 + $0x40] sm:$0xff]
        %v178 = vld [vmem:[%s168 + $0x48] sm:$0xff]
        %v179 = vld [vmem:[%s168 + $0x50] sm:$0xff]
        %v180 = vld [vmem:[%s168 + $0x58] sm:$0xff]
        %v181 = vld [vmem:[%s168 + $0x60] sm:$0xff]
        %v182 = vld [vmem:[%s168 + $0x68] sm:$0xff]
        %v183 = vld [vmem:[%s168 + $0x70] sm:$0xff]
        %v184 = vld [vmem:[%s168 + $0x78] sm:$0xff]
        %v185 = vld [vmem:[%s168 + $0x80] sm:$0xff]
        %v186 = vld [vmem:[%s168 + $0x88] sm:$0xff]
        %v187 = vld [vmem:[%s168 + $0x90] sm:$0xff]
        %v188 = vld [vmem:[%s168 + $0x98] sm:$0xff]
        %v189 = vld [vmem:[%s168 + $0xa0] sm:$0xff]
        %v190 = vld [vmem:[%s168 + $0xa8] sm:$0xff]
        %v191 = vld [vmem:[%s168 + $0xb0] sm:$0xff]
        %v192 = vld [vmem:[%s168 + $0xb8] sm:$0xff]
        %v193 = vld [vmem:[%s168 + $0xc0] sm:$0xff]
        %v194 = vld [vmem:[%s168 + $0xc8] sm:$0xff]
        %v195 = vld [vmem:[%s168 + $0xd0] sm:$0xff]
        %v196 = vld [vmem:[%s168 + $0xd8] sm:$0xff]
        %v197 = vld [vmem:[%s168 + $0xe0] sm:$0xff]
        %v198 = vld [vmem:[%s168 + $0xe8] sm:$0xff]
        %v199 = vld [vmem:[%s168 + $0xf0] sm:$0xff]
        %v200 = vld [vmem:[%s168 + $0xf8] sm:$0xff]
        %v201 = vld [vmem:[%s1] sm:$0xf]
        %s202 = scalar_lea.vmem %s1, 4
        %v203 = vld [vmem:[%s202] sm:$0xf]
        %vm204 = vcmask 31744
        %v206 = vsel %vm204, 0.0, 0
        %v209 = vsel %vm204, %v169, 0
        %v212 = vsel %vm204, %v170, 0
        %v215 = vsel %vm204, %v171, 0
        %v218 = vsel %vm204, %v172, 0
        %v221 = vsel %vm204, %v173, 0
        %v224 = vsel %vm204, %v174, 0
        %v227 = vsel %vm204, %v175, 0
        %v230 = vsel %vm204, %v176, 0
        %v233 = vsel %vm204, %v177, 0
        %v236 = vsel %vm204, %v178, 0
        %v239 = vsel %vm204, %v179, 0
        %v242 = vsel %vm204, %v180, 0
        %v245 = vsel %vm204, %v181, 0
        %v248 = vsel %vm204, %v182, 0
        %v251 = vsel %vm204, %v183, 0
        %v254 = vsel %vm204, %v184, 0
        %v257 = vsel %vm204, %v185, 0
        %v260 = vsel %vm204, %v186, 0
        %v263 = vsel %vm204, %v187, 0
        %v266 = vsel %vm204, %v188, 0
        %v269 = vsel %vm204, %v189, 0
        %v272 = vsel %vm204, %v190, 0
        %v275 = vsel %vm204, %v191, 0
        %v278 = vsel %vm204, %v192, 0
        %v281 = vsel %vm204, %v193, 0
        %v284 = vsel %vm204, %v194, 0
        %v287 = vsel %vm204, %v195, 0
        %v290 = vsel %vm204, %v196, 0
        %v293 = vsel %vm204, %v197, 0
        %v296 = vsel %vm204, %v198, 0
        %vm298 = vcmask 1043456
        %v300 = vsel %vm298, %v203, 0
        %302 = vmatpush.msra.mxu0 0.0
        %303 = vmatpush.msra.mxu0 0.0
        %304 = vmatpush.msra.mxu0 0.0
        %305 = vmatpush.msra.mxu0 0.0
        %306 = vmatpush.msra.mxu0 0.0
        %307 = vmatpush.msra.mxu0 0.0
        %308 = vmatpush.msra.mxu0 0.0
        %309 = vmatpush.msra.mxu0 0.0
        %310 = vmatpush.msra.mxu0 0.0
        %311 = vmatpush.msra.mxu0 0.0
        %312 = vmatpush.msra.mxu0 0.0
        %313 = vmatpush.msra.mxu0 0.0
        %314 = vmatpush.msra.mxu0 0.0
        %315 = vmatpush.msra.mxu0 0.0
        %316 = vmatpush.msra.mxu0 0.0
        %317 = vmatpush.msra.mxu0 %v300
        %318 = vmatmul.f32.gmra.mxu0 %v206
        %v319 = vpop.f32.mrf.mxu0
        %v320 = vadd.f32 0.0, %v319
        %321 = vmatmul.f32.gmra.mxu0 %v206
        %v322 = vpop.f32.mrf.mxu0
        %v323 = vadd.f32 0.0, %v322
        %324 = vmatmul.f32.gmra.mxu0 %v209
        %v325 = vpop.f32.mrf.mxu0
        %v326 = vadd.f32 0.0, %v325
        %327 = vmatmul.f32.gmra.mxu0 %v212
        %v328 = vpop.f32.mrf.mxu0
        %v329 = vadd.f32 0.0, %v328
        %330 = vmatmul.f32.gmra.mxu0 %v215
        %v331 = vpop.f32.mrf.mxu0
        %v332 = vadd.f32 0.0, %v331
        %333 = vmatmul.f32.gmra.mxu0 %v218
        %v334 = vpop.f32.mrf.mxu0
        %v335 = vadd.f32 0.0, %v334
        %336 = vmatmul.f32.gmra.mxu0 %v221
        %v337 = vpop.f32.mrf.mxu0
        %v338 = vadd.f32 0.0, %v337
        %339 = vmatmul.f32.gmra.mxu0 %v224
        %v340 = vpop.f32.mrf.mxu0
        %v341 = vadd.f32 0.0, %v340
        %342 = vmatmul.f32.gmra.mxu0 %v227
        %v343 = vpop.f32.mrf.mxu0
        %v344 = vadd.f32 0.0, %v343
        %345 = vmatmul.f32.gmra.mxu0 %v230
        %v346 = vpop.f32.mrf.mxu0
        %v347 = vadd.f32 0.0, %v346
        %348 = vmatmul.f32.gmra.mxu0 %v233
        %v349 = vpop.f32.mrf.mxu0
        %v350 = vadd.f32 0.0, %v349
        %351 = vmatmul.f32.gmra.mxu0 %v236
        %v352 = vpop.f32.mrf.mxu0
        %v353 = vadd.f32 0.0, %v352
        %354 = vmatmul.f32.gmra.mxu0 %v239
        %v355 = vpop.f32.mrf.mxu0
        %v356 = vadd.f32 0.0, %v355
        %357 = vmatmul.f32.gmra.mxu0 %v242
        %v358 = vpop.f32.mrf.mxu0
        %v359 = vadd.f32 0.0, %v358
        %360 = vmatmul.f32.gmra.mxu0 %v245
        %v361 = vpop.f32.mrf.mxu0
        %v362 = vadd.f32 0.0, %v361
        %363 = vmatmul.f32.gmra.mxu0 %v248
        %v364 = vpop.f32.mrf.mxu0
        %v365 = vadd.f32 0.0, %v364
        %366 = vmatmul.f32.gmra.mxu0 %v251
        %v367 = vpop.f32.mrf.mxu0
        %v368 = vadd.f32 0.0, %v367
        %369 = vmatmul.f32.gmra.mxu0 %v254
        %v370 = vpop.f32.mrf.mxu0
        %v371 = vadd.f32 0.0, %v370
        %372 = vmatmul.f32.gmra.mxu0 %v257
        %v373 = vpop.f32.mrf.mxu0
        %v374 = vadd.f32 0.0, %v373
        %375 = vmatmul.f32.gmra.mxu0 %v260
        %v376 = vpop.f32.mrf.mxu0
        %v377 = vadd.f32 0.0, %v376
        %378 = vmatmul.f32.gmra.mxu0 %v263
        %v379 = vpop.f32.mrf.mxu0
        %v380 = vadd.f32 0.0, %v379
        %381 = vmatmul.f32.gmra.mxu0 %v266
        %v382 = vpop.f32.mrf.mxu0
        %v383 = vadd.f32 0.0, %v382
        %384 = vmatmul.f32.gmra.mxu0 %v269
        %v385 = vpop.f32.mrf.mxu0
        %v386 = vadd.f32 0.0, %v385
        %387 = vmatmul.f32.gmra.mxu0 %v272
        %v388 = vpop.f32.mrf.mxu0
        %v389 = vadd.f32 0.0, %v388
        %390 = vmatmul.f32.gmra.mxu0 %v275
        %v391 = vpop.f32.mrf.mxu0
        %v392 = vadd.f32 0.0, %v391
        %393 = vmatmul.f32.gmra.mxu0 %v278
        %v394 = vpop.f32.mrf.mxu0
        %v395 = vadd.f32 0.0, %v394
        %396 = vmatmul.f32.gmra.mxu0 %v281
        %v397 = vpop.f32.mrf.mxu0
        %v398 = vadd.f32 0.0, %v397
        %399 = vmatmul.f32.gmra.mxu0 %v284
        %v400 = vpop.f32.mrf.mxu0
        %v401 = vadd.f32 0.0, %v400
        %402 = vmatmul.f32.gmra.mxu0 %v287
        %v403 = vpop.f32.mrf.mxu0
        %v404 = vadd.f32 0.0, %v403
        %405 = vmatmul.f32.gmra.mxu0 %v290
        %v406 = vpop.f32.mrf.mxu0
        %v407 = vadd.f32 0.0, %v406
        %408 = vmatmul.f32.gmra.mxu0 %v293
        %v409 = vpop.f32.mrf.mxu0
        %v410 = vadd.f32 0.0, %v409
        %411 = vmatmul.f32.gmra.mxu0 %v296
        %v412 = vpop.f32.mrf.mxu0
        %v413 = vadd.f32 0.0, %v412
        %414 = vdwg.mxu0
        %v416 = vsel %vm298, %v201, 0
        %418 = vmatpush.msra.mxu0 0.0
        %419 = vmatpush.msra.mxu0 0.0
        %420 = vmatpush.msra.mxu0 0.0
        %421 = vmatpush.msra.mxu0 0.0
        %422 = vmatpush.msra.mxu0 0.0
        %423 = vmatpush.msra.mxu0 0.0
        %424 = vmatpush.msra.mxu0 0.0
        %425 = vmatpush.msra.mxu0 0.0
        %426 = vmatpush.msra.mxu0 0.0
        %427 = vmatpush.msra.mxu0 0.0
        %428 = vmatpush.msra.mxu0 0.0
        %429 = vmatpush.msra.mxu0 0.0
        %430 = vmatpush.msra.mxu0 0.0
        %431 = vmatpush.msra.mxu0 0.0
        %432 = vmatpush.msra.mxu0 0.0
        %433 = vmatpush.msra.mxu0 %v416
        %434 = vmatmul.f32.gmra.mxu0 %v206
        %v435 = vpop.f32.mrf.mxu0
        %v436 = vadd.f32 %v320, %v435
        %437 = vmatmul.f32.gmra.mxu0 %v206
        %v438 = vpop.f32.mrf.mxu0
        %v439 = vadd.f32 %v323, %v438
        %440 = vmatmul.f32.gmra.mxu0 %v206
        %v441 = vpop.f32.mrf.mxu0
        %v442 = vadd.f32 %v326, %v441
        %443 = vmatmul.f32.gmra.mxu0 %v206
        %v444 = vpop.f32.mrf.mxu0
        %v445 = vadd.f32 %v329, %v444
        %446 = vmatmul.f32.gmra.mxu0 %v209
        %v447 = vpop.f32.mrf.mxu0
        %v448 = vadd.f32 %v332, %v447
        %449 = vmatmul.f32.gmra.mxu0 %v212
        %v450 = vpop.f32.mrf.mxu0
        %v451 = vadd.f32 %v335, %v450
        %452 = vmatmul.f32.gmra.mxu0 %v215
        %v453 = vpop.f32.mrf.mxu0
        %v454 = vadd.f32 %v338, %v453
        %455 = vmatmul.f32.gmra.mxu0 %v218
        %v456 = vpop.f32.mrf.mxu0
        %v457 = vadd.f32 %v341, %v456
        %458 = vmatmul.f32.gmra.mxu0 %v221
        %v459 = vpop.f32.mrf.mxu0
        %v460 = vadd.f32 %v344, %v459
        %461 = vmatmul.f32.gmra.mxu0 %v224
        %v462 = vpop.f32.mrf.mxu0
        %v463 = vadd.f32 %v347, %v462
        %464 = vmatmul.f32.gmra.mxu0 %v227
        %v465 = vpop.f32.mrf.mxu0
        %v466 = vadd.f32 %v350, %v465
        %467 = vmatmul.f32.gmra.mxu0 %v230
        %v468 = vpop.f32.mrf.mxu0
        %v469 = vadd.f32 %v353, %v468
        %470 = vmatmul.f32.gmra.mxu0 %v233
        %v471 = vpop.f32.mrf.mxu0
        %v472 = vadd.f32 %v356, %v471
        %473 = vmatmul.f32.gmra.mxu0 %v236
        %v474 = vpop.f32.mrf.mxu0
        %v475 = vadd.f32 %v359, %v474
        %476 = vmatmul.f32.gmra.mxu0 %v239
        %v477 = vpop.f32.mrf.mxu0
        %v478 = vadd.f32 %v362, %v477
        %479 = vmatmul.f32.gmra.mxu0 %v242
        %v480 = vpop.f32.mrf.mxu0
        %v481 = vadd.f32 %v365, %v480
        %482 = vmatmul.f32.gmra.mxu0 %v245
        %v483 = vpop.f32.mrf.mxu0
        %v484 = vadd.f32 %v368, %v483
        %485 = vmatmul.f32.gmra.mxu0 %v248
        %v486 = vpop.f32.mrf.mxu0
        %v487 = vadd.f32 %v371, %v486
        %488 = vmatmul.f32.gmra.mxu0 %v251
        %v489 = vpop.f32.mrf.mxu0
        %v490 = vadd.f32 %v374, %v489
        %491 = vmatmul.f32.gmra.mxu0 %v254
        %v492 = vpop.f32.mrf.mxu0
        %v493 = vadd.f32 %v377, %v492
        %494 = vmatmul.f32.gmra.mxu0 %v257
        %v495 = vpop.f32.mrf.mxu0
        %v496 = vadd.f32 %v380, %v495
        %497 = vmatmul.f32.gmra.mxu0 %v260
        %v498 = vpop.f32.mrf.mxu0
        %v499 = vadd.f32 %v383, %v498
        %500 = vmatmul.f32.gmra.mxu0 %v263
        %v501 = vpop.f32.mrf.mxu0
        %v502 = vadd.f32 %v386, %v501
        %503 = vmatmul.f32.gmra.mxu0 %v266
        %v504 = vpop.f32.mrf.mxu0
        %v505 = vadd.f32 %v389, %v504
        %506 = vmatmul.f32.gmra.mxu0 %v269
        %v507 = vpop.f32.mrf.mxu0
        %v508 = vadd.f32 %v392, %v507
        %509 = vmatmul.f32.gmra.mxu0 %v272
        %v510 = vpop.f32.mrf.mxu0
        %v511 = vadd.f32 %v395, %v510
        %512 = vmatmul.f32.gmra.mxu0 %v275
        %v513 = vpop.f32.mrf.mxu0
        %v514 = vadd.f32 %v398, %v513
        %515 = vmatmul.f32.gmra.mxu0 %v278
        %v516 = vpop.f32.mrf.mxu0
        %v517 = vadd.f32 %v401, %v516
        %518 = vmatmul.f32.gmra.mxu0 %v281
        %v519 = vpop.f32.mrf.mxu0
        %v520 = vadd.f32 %v404, %v519
        %521 = vmatmul.f32.gmra.mxu0 %v284
        %v522 = vpop.f32.mrf.mxu0
        %v523 = vadd.f32 %v407, %v522
        %524 = vmatmul.f32.gmra.mxu0 %v287
        %v525 = vpop.f32.mrf.mxu0
        %v526 = vadd.f32 %v410, %v525
        %527 = vmatmul.f32.gmra.mxu0 %v290
        %v528 = vpop.f32.mrf.mxu0
        %v529 = vadd.f32 %v413, %v528
        %530 = vdwg.mxu0
        %s531 = scalar_lea.vmem %s1, 8
        %v532 = vld [vmem:[%s531] sm:$0xf]
        %v534 = vsel %vm204, %v199, 0
        %v537 = vsel %vm204, %v200, 0
        %v540 = vsel %vm298, %v532, 0
        %542 = vmatpush.msra.mxu0 0.0
        %543 = vmatpush.msra.mxu0 0.0
        %544 = vmatpush.msra.mxu0 0.0
        %545 = vmatpush.msra.mxu0 0.0
        %546 = vmatpush.msra.mxu0 0.0
        %547 = vmatpush.msra.mxu0 0.0
        %548 = vmatpush.msra.mxu0 0.0
        %549 = vmatpush.msra.mxu0 0.0
        %550 = vmatpush.msra.mxu0 0.0
        %551 = vmatpush.msra.mxu0 0.0
        %552 = vmatpush.msra.mxu0 0.0
        %553 = vmatpush.msra.mxu0 0.0
        %554 = vmatpush.msra.mxu0 0.0
        %555 = vmatpush.msra.mxu0 0.0
        %556 = vmatpush.msra.mxu0 0.0
        %557 = vmatpush.msra.mxu0 %v540
        %558 = vmatmul.f32.gmra.mxu0 %v209
        %v559 = vpop.f32.mrf.mxu0
        %v560 = vadd.f32 0.0, %v559
        %561 = vmatmul.f32.gmra.mxu0 %v212
        %v562 = vpop.f32.mrf.mxu0
        %v563 = vadd.f32 0.0, %v562
        %564 = vmatmul.f32.gmra.mxu0 %v215
        %v565 = vpop.f32.mrf.mxu0
        %v566 = vadd.f32 0.0, %v565
        %567 = vmatmul.f32.gmra.mxu0 %v218
        %v568 = vpop.f32.mrf.mxu0
        %v569 = vadd.f32 0.0, %v568
        %570 = vmatmul.f32.gmra.mxu0 %v221
        %v571 = vpop.f32.mrf.mxu0
        %v572 = vadd.f32 0.0, %v571
        %573 = vmatmul.f32.gmra.mxu0 %v224
        %v574 = vpop.f32.mrf.mxu0
        %v575 = vadd.f32 0.0, %v574
        %576 = vmatmul.f32.gmra.mxu0 %v227
        %v577 = vpop.f32.mrf.mxu0
        %v578 = vadd.f32 0.0, %v577
        %579 = vmatmul.f32.gmra.mxu0 %v230
        %v580 = vpop.f32.mrf.mxu0
        %v581 = vadd.f32 0.0, %v580
        %582 = vmatmul.f32.gmra.mxu0 %v233
        %v583 = vpop.f32.mrf.mxu0
        %v584 = vadd.f32 0.0, %v583
        %585 = vmatmul.f32.gmra.mxu0 %v236
        %v586 = vpop.f32.mrf.mxu0
        %v587 = vadd.f32 0.0, %v586
        %588 = vmatmul.f32.gmra.mxu0 %v239
        %v589 = vpop.f32.mrf.mxu0
        %v590 = vadd.f32 0.0, %v589
        %591 = vmatmul.f32.gmra.mxu0 %v242
        %v592 = vpop.f32.mrf.mxu0
        %v593 = vadd.f32 0.0, %v592
        %594 = vmatmul.f32.gmra.mxu0 %v245
        %v595 = vpop.f32.mrf.mxu0
        %v596 = vadd.f32 0.0, %v595
        %597 = vmatmul.f32.gmra.mxu0 %v248
        %v598 = vpop.f32.mrf.mxu0
        %v599 = vadd.f32 0.0, %v598
        %600 = vmatmul.f32.gmra.mxu0 %v251
        %v601 = vpop.f32.mrf.mxu0
        %v602 = vadd.f32 0.0, %v601
        %603 = vmatmul.f32.gmra.mxu0 %v254
        %v604 = vpop.f32.mrf.mxu0
        %v605 = vadd.f32 0.0, %v604
        %606 = vmatmul.f32.gmra.mxu0 %v257
        %v607 = vpop.f32.mrf.mxu0
        %v608 = vadd.f32 0.0, %v607
        %609 = vmatmul.f32.gmra.mxu0 %v260
        %v610 = vpop.f32.mrf.mxu0
        %v611 = vadd.f32 0.0, %v610
        %612 = vmatmul.f32.gmra.mxu0 %v263
        %v613 = vpop.f32.mrf.mxu0
        %v614 = vadd.f32 0.0, %v613
        %615 = vmatmul.f32.gmra.mxu0 %v266
        %v616 = vpop.f32.mrf.mxu0
        %v617 = vadd.f32 0.0, %v616
        %618 = vmatmul.f32.gmra.mxu0 %v269
        %v619 = vpop.f32.mrf.mxu0
        %v620 = vadd.f32 0.0, %v619
        %621 = vmatmul.f32.gmra.mxu0 %v272
        %v622 = vpop.f32.mrf.mxu0
        %v623 = vadd.f32 0.0, %v622
        %624 = vmatmul.f32.gmra.mxu0 %v275
        %v625 = vpop.f32.mrf.mxu0
        %v626 = vadd.f32 0.0, %v625
        %627 = vmatmul.f32.gmra.mxu0 %v278
        %v628 = vpop.f32.mrf.mxu0
        %v629 = vadd.f32 0.0, %v628
        %630 = vmatmul.f32.gmra.mxu0 %v281
        %v631 = vpop.f32.mrf.mxu0
        %v632 = vadd.f32 0.0, %v631
        %633 = vmatmul.f32.gmra.mxu0 %v284
        %v634 = vpop.f32.mrf.mxu0
        %v635 = vadd.f32 0.0, %v634
        %636 = vmatmul.f32.gmra.mxu0 %v287
        %v637 = vpop.f32.mrf.mxu0
        %v638 = vadd.f32 0.0, %v637
        %639 = vmatmul.f32.gmra.mxu0 %v290
        %v640 = vpop.f32.mrf.mxu0
        %v641 = vadd.f32 0.0, %v640
        %642 = vmatmul.f32.gmra.mxu0 %v293
        %v643 = vpop.f32.mrf.mxu0
        %v644 = vadd.f32 0.0, %v643
        %645 = vmatmul.f32.gmra.mxu0 %v296
        %v646 = vpop.f32.mrf.mxu0
        %v647 = vadd.f32 0.0, %v646
        %648 = vmatmul.f32.gmra.mxu0 %v534
        %v649 = vpop.f32.mrf.mxu0
        %v650 = vadd.f32 0.0, %v649
        %651 = vmatmul.f32.gmra.mxu0 %v537
        %v652 = vpop.f32.mrf.mxu0
        %v653 = vadd.f32 0.0, %v652
        %654 = vdwg.mxu0
        %v655 = vadd.f32 %v436, %v560
        %v656 = vadd.f32 %v439, %v563
        %v657 = vadd.f32 %v442, %v566
        %v658 = vadd.f32 %v445, %v569
        %v659 = vadd.f32 %v448, %v572
        %v660 = vadd.f32 %v451, %v575
        %v661 = vadd.f32 %v454, %v578
        %v662 = vadd.f32 %v457, %v581
        %v663 = vadd.f32 %v460, %v584
        %v664 = vadd.f32 %v463, %v587
        %v665 = vadd.f32 %v466, %v590
        %v666 = vadd.f32 %v469, %v593
        %v667 = vadd.f32 %v472, %v596
        %v668 = vadd.f32 %v475, %v599
        %v669 = vadd.f32 %v478, %v602
        %v670 = vadd.f32 %v481, %v605
        %v671 = vadd.f32 %v484, %v608
        %v672 = vadd.f32 %v487, %v611
        %v673 = vadd.f32 %v490, %v614
        %v674 = vadd.f32 %v493, %v617
        %v675 = vadd.f32 %v496, %v620
        %v676 = vadd.f32 %v499, %v623
        %v677 = vadd.f32 %v502, %v626
        %v678 = vadd.f32 %v505, %v629
        %v679 = vadd.f32 %v508, %v632
        %v680 = vadd.f32 %v511, %v635
        %v681 = vadd.f32 %v514, %v638
        %v682 = vadd.f32 %v517, %v641
        %v683 = vadd.f32 %v520, %v644
        %v684 = vadd.f32 %v523, %v647
        %v685 = vadd.f32 %v526, %v650
        %v686 = vadd.f32 %v529, %v653
        %s687 = scalar_lea.vmem %s1, 12
        %v688 = vld [vmem:[%s687] sm:$0xf]
        %v690 = vsel %vm298, %v688, 0
        %692 = vmatpush.msra.mxu0 0.0
        %693 = vmatpush.msra.mxu0 0.0
        %694 = vmatpush.msra.mxu0 0.0
        %695 = vmatpush.msra.mxu0 0.0
        %696 = vmatpush.msra.mxu0 0.0
        %697 = vmatpush.msra.mxu0 0.0
        %698 = vmatpush.msra.mxu0 0.0
        %699 = vmatpush.msra.mxu0 0.0
        %700 = vmatpush.msra.mxu0 0.0
        %701 = vmatpush.msra.mxu0 0.0
        %702 = vmatpush.msra.mxu0 0.0
        %703 = vmatpush.msra.mxu0 0.0
        %704 = vmatpush.msra.mxu0 0.0
        %705 = vmatpush.msra.mxu0 0.0
        %706 = vmatpush.msra.mxu0 0.0
        %707 = vmatpush.msra.mxu0 %v690
        %708 = vmatmul.f32.gmra.mxu0 %v215
        %v709 = vpop.f32.mrf.mxu0
        %v710 = vadd.f32 0.0, %v709
        %711 = vmatmul.f32.gmra.mxu0 %v218
        %v712 = vpop.f32.mrf.mxu0
        %v713 = vadd.f32 0.0, %v712
        %714 = vmatmul.f32.gmra.mxu0 %v221
        %v715 = vpop.f32.mrf.mxu0
        %v716 = vadd.f32 0.0, %v715
        %717 = vmatmul.f32.gmra.mxu0 %v224
        %v718 = vpop.f32.mrf.mxu0
        %v719 = vadd.f32 0.0, %v718
        %720 = vmatmul.f32.gmra.mxu0 %v227
        %v721 = vpop.f32.mrf.mxu0
        %v722 = vadd.f32 0.0, %v721
        %723 = vmatmul.f32.gmra.mxu0 %v230
        %v724 = vpop.f32.mrf.mxu0
        %v725 = vadd.f32 0.0, %v724
        %726 = vmatmul.f32.gmra.mxu0 %v233
        %v727 = vpop.f32.mrf.mxu0
        %v728 = vadd.f32 0.0, %v727
        %729 = vmatmul.f32.gmra.mxu0 %v236
        %v730 = vpop.f32.mrf.mxu0
        %v731 = vadd.f32 0.0, %v730
        %732 = vmatmul.f32.gmra.mxu0 %v239
        %v733 = vpop.f32.mrf.mxu0
        %v734 = vadd.f32 0.0, %v733
        %735 = vmatmul.f32.gmra.mxu0 %v242
        %v736 = vpop.f32.mrf.mxu0
        %v737 = vadd.f32 0.0, %v736
        %738 = vmatmul.f32.gmra.mxu0 %v245
        %v739 = vpop.f32.mrf.mxu0
        %v740 = vadd.f32 0.0, %v739
        %741 = vmatmul.f32.gmra.mxu0 %v248
        %v742 = vpop.f32.mrf.mxu0
        %v743 = vadd.f32 0.0, %v742
        %744 = vmatmul.f32.gmra.mxu0 %v251
        %v745 = vpop.f32.mrf.mxu0
        %v746 = vadd.f32 0.0, %v745
        %747 = vmatmul.f32.gmra.mxu0 %v254
        %v748 = vpop.f32.mrf.mxu0
        %v749 = vadd.f32 0.0, %v748
        %750 = vmatmul.f32.gmra.mxu0 %v257
        %v751 = vpop.f32.mrf.mxu0
        %v752 = vadd.f32 0.0, %v751
        %753 = vmatmul.f32.gmra.mxu0 %v260
        %v754 = vpop.f32.mrf.mxu0
        %v755 = vadd.f32 0.0, %v754
        %756 = vmatmul.f32.gmra.mxu0 %v263
        %v757 = vpop.f32.mrf.mxu0
        %v758 = vadd.f32 0.0, %v757
        %759 = vmatmul.f32.gmra.mxu0 %v266
        %v760 = vpop.f32.mrf.mxu0
        %v761 = vadd.f32 0.0, %v760
        %762 = vmatmul.f32.gmra.mxu0 %v269
        %v763 = vpop.f32.mrf.mxu0
        %v764 = vadd.f32 0.0, %v763
        %765 = vmatmul.f32.gmra.mxu0 %v272
        %v766 = vpop.f32.mrf.mxu0
        %v767 = vadd.f32 0.0, %v766
        %768 = vmatmul.f32.gmra.mxu0 %v275
        %v769 = vpop.f32.mrf.mxu0
        %v770 = vadd.f32 0.0, %v769
        %771 = vmatmul.f32.gmra.mxu0 %v278
        %v772 = vpop.f32.mrf.mxu0
        %v773 = vadd.f32 0.0, %v772
        %774 = vmatmul.f32.gmra.mxu0 %v281
        %v775 = vpop.f32.mrf.mxu0
        %v776 = vadd.f32 0.0, %v775
        %777 = vmatmul.f32.gmra.mxu0 %v284
        %v778 = vpop.f32.mrf.mxu0
        %v779 = vadd.f32 0.0, %v778
        %780 = vmatmul.f32.gmra.mxu0 %v287
        %v781 = vpop.f32.mrf.mxu0
        %v782 = vadd.f32 0.0, %v781
        %783 = vmatmul.f32.gmra.mxu0 %v290
        %v784 = vpop.f32.mrf.mxu0
        %v785 = vadd.f32 0.0, %v784
        %786 = vmatmul.f32.gmra.mxu0 %v293
        %v787 = vpop.f32.mrf.mxu0
        %v788 = vadd.f32 0.0, %v787
        %789 = vmatmul.f32.gmra.mxu0 %v296
        %v790 = vpop.f32.mrf.mxu0
        %v791 = vadd.f32 0.0, %v790
        %792 = vmatmul.f32.gmra.mxu0 %v534
        %v793 = vpop.f32.mrf.mxu0
        %v794 = vadd.f32 0.0, %v793
        %795 = vmatmul.f32.gmra.mxu0 %v537
        %v796 = vpop.f32.mrf.mxu0
        %v797 = vadd.f32 0.0, %v796
        %798 = vmatmul.f32.gmra.mxu0 %v206
        %v799 = vpop.f32.mrf.mxu0
        %v800 = vadd.f32 0.0, %v799
        %801 = vmatmul.f32.gmra.mxu0 %v206
        %v802 = vpop.f32.mrf.mxu0
        %v803 = vadd.f32 0.0, %v802
        %804 = vdwg.mxu0
        %v805 = vadd.f32 %v655, %v710
        %v806 = vadd.f32 %v656, %v713
        %v807 = vadd.f32 %v657, %v716
        %v808 = vadd.f32 %v658, %v719
        %v809 = vadd.f32 %v659, %v722
        %v810 = vadd.f32 %v660, %v725
        %v811 = vadd.f32 %v661, %v728
        %v812 = vadd.f32 %v662, %v731
        %v813 = vadd.f32 %v663, %v734
        %v814 = vadd.f32 %v664, %v737
        %v815 = vadd.f32 %v665, %v740
        %v816 = vadd.f32 %v666, %v743
        %v817 = vadd.f32 %v667, %v746
        %v818 = vadd.f32 %v668, %v749
        %v819 = vadd.f32 %v669, %v752
        %v820 = vadd.f32 %v670, %v755
        %v821 = vadd.f32 %v671, %v758
        %v822 = vadd.f32 %v672, %v761
        %v823 = vadd.f32 %v673, %v764
        %v824 = vadd.f32 %v674, %v767
        %v825 = vadd.f32 %v675, %v770
        %v826 = vadd.f32 %v676, %v773
        %v827 = vadd.f32 %v677, %v776
        %v828 = vadd.f32 %v678, %v779
        %v829 = vadd.f32 %v679, %v782
        %v830 = vadd.f32 %v680, %v785
        %v831 = vadd.f32 %v681, %v788
        %v832 = vadd.f32 %v682, %v791
        %v833 = vadd.f32 %v683, %v794
        %v834 = vadd.f32 %v684, %v797
        %v835 = vadd.f32 %v685, %v800
        %v836 = vadd.f32 %v686, %v803
        %s837 = scalar_lea.vmem %s1, 16
        %v838 = vld [vmem:[%s837] sm:$0xf]
        %v840 = vsel %vm298, %v838, 0
        %842 = vmatpush.msra.mxu0 0.0
        %843 = vmatpush.msra.mxu0 0.0
        %844 = vmatpush.msra.mxu0 0.0
        %845 = vmatpush.msra.mxu0 0.0
        %846 = vmatpush.msra.mxu0 0.0
        %847 = vmatpush.msra.mxu0 0.0
        %848 = vmatpush.msra.mxu0 0.0
        %849 = vmatpush.msra.mxu0 0.0
        %850 = vmatpush.msra.mxu0 0.0
        %851 = vmatpush.msra.mxu0 0.0
        %852 = vmatpush.msra.mxu0 0.0
        %853 = vmatpush.msra.mxu0 0.0
        %854 = vmatpush.msra.mxu0 0.0
        %855 = vmatpush.msra.mxu0 0.0
        %856 = vmatpush.msra.mxu0 0.0
        %857 = vmatpush.msra.mxu0 %v840
        %858 = vmatmul.f32.gmra.mxu0 %v221
        %v859 = vpop.f32.mrf.mxu0
        %v860 = vadd.f32 0.0, %v859
        %861 = vmatmul.f32.gmra.mxu0 %v224
        %v862 = vpop.f32.mrf.mxu0
        %v863 = vadd.f32 0.0, %v862
        %864 = vmatmul.f32.gmra.mxu0 %v227
        %v865 = vpop.f32.mrf.mxu0
        %v866 = vadd.f32 0.0, %v865
        %867 = vmatmul.f32.gmra.mxu0 %v230
        %v868 = vpop.f32.mrf.mxu0
        %v869 = vadd.f32 0.0, %v868
        %870 = vmatmul.f32.gmra.mxu0 %v233
        %v871 = vpop.f32.mrf.mxu0
        %v872 = vadd.f32 0.0, %v871
        %873 = vmatmul.f32.gmra.mxu0 %v236
        %v874 = vpop.f32.mrf.mxu0
        %v875 = vadd.f32 0.0, %v874
        %876 = vmatmul.f32.gmra.mxu0 %v239
        %v877 = vpop.f32.mrf.mxu0
        %v878 = vadd.f32 0.0, %v877
        %879 = vmatmul.f32.gmra.mxu0 %v242
        %v880 = vpop.f32.mrf.mxu0
        %v881 = vadd.f32 0.0, %v880
        %882 = vmatmul.f32.gmra.mxu0 %v245
        %v883 = vpop.f32.mrf.mxu0
        %v884 = vadd.f32 0.0, %v883
        %885 = vmatmul.f32.gmra.mxu0 %v248
        %v886 = vpop.f32.mrf.mxu0
        %v887 = vadd.f32 0.0, %v886
        %888 = vmatmul.f32.gmra.mxu0 %v251
        %v889 = vpop.f32.mrf.mxu0
        %v890 = vadd.f32 0.0, %v889
        %891 = vmatmul.f32.gmra.mxu0 %v254
        %v892 = vpop.f32.mrf.mxu0
        %v893 = vadd.f32 0.0, %v892
        %894 = vmatmul.f32.gmra.mxu0 %v257
        %v895 = vpop.f32.mrf.mxu0
        %v896 = vadd.f32 0.0, %v895
        %897 = vmatmul.f32.gmra.mxu0 %v260
        %v898 = vpop.f32.mrf.mxu0
        %v899 = vadd.f32 0.0, %v898
        %900 = vmatmul.f32.gmra.mxu0 %v263
        %v901 = vpop.f32.mrf.mxu0
        %v902 = vadd.f32 0.0, %v901
        %903 = vmatmul.f32.gmra.mxu0 %v266
        %v904 = vpop.f32.mrf.mxu0
        %v905 = vadd.f32 0.0, %v904
        %906 = vmatmul.f32.gmra.mxu0 %v269
        %v907 = vpop.f32.mrf.mxu0
        %v908 = vadd.f32 0.0, %v907
        %909 = vmatmul.f32.gmra.mxu0 %v272
        %v910 = vpop.f32.mrf.mxu0
        %v911 = vadd.f32 0.0, %v910
        %912 = vmatmul.f32.gmra.mxu0 %v275
        %v913 = vpop.f32.mrf.mxu0
        %v914 = vadd.f32 0.0, %v913
        %915 = vmatmul.f32.gmra.mxu0 %v278
        %v916 = vpop.f32.mrf.mxu0
        %v917 = vadd.f32 0.0, %v916
        %918 = vmatmul.f32.gmra.mxu0 %v281
        %v919 = vpop.f32.mrf.mxu0
        %v920 = vadd.f32 0.0, %v919
        %921 = vmatmul.f32.gmra.mxu0 %v284
        %v922 = vpop.f32.mrf.mxu0
        %v923 = vadd.f32 0.0, %v922
        %924 = vmatmul.f32.gmra.mxu0 %v287
        %v925 = vpop.f32.mrf.mxu0
        %v926 = vadd.f32 0.0, %v925
        %927 = vmatmul.f32.gmra.mxu0 %v290
        %v928 = vpop.f32.mrf.mxu0
        %v929 = vadd.f32 0.0, %v928
        %930 = vmatmul.f32.gmra.mxu0 %v293
        %v931 = vpop.f32.mrf.mxu0
        %v932 = vadd.f32 0.0, %v931
        %933 = vmatmul.f32.gmra.mxu0 %v296
        %v934 = vpop.f32.mrf.mxu0
        %v935 = vadd.f32 0.0, %v934
        %936 = vmatmul.f32.gmra.mxu0 %v534
        %v937 = vpop.f32.mrf.mxu0
        %v938 = vadd.f32 0.0, %v937
        %939 = vmatmul.f32.gmra.mxu0 %v537
        %v940 = vpop.f32.mrf.mxu0
        %v941 = vadd.f32 0.0, %v940
        %942 = vmatmul.f32.gmra.mxu0 %v206
        %v943 = vpop.f32.mrf.mxu0
        %v944 = vadd.f32 0.0, %v943
        %945 = vmatmul.f32.gmra.mxu0 %v206
        %v946 = vpop.f32.mrf.mxu0
        %v947 = vadd.f32 0.0, %v946
        %948 = vmatmul.f32.gmra.mxu0 %v206
        %v949 = vpop.f32.mrf.mxu0
        %v950 = vadd.f32 0.0, %v949
        %951 = vmatmul.f32.gmra.mxu0 %v206
        %v952 = vpop.f32.mrf.mxu0
        %v953 = vadd.f32 0.0, %v952
        %954 = vdwg.mxu0
        %v955 = vadd.f32 %v805, %v860
        %v956 = vadd.f32 %v806, %v863
        %v957 = vadd.f32 %v807, %v866
        %v958 = vadd.f32 %v808, %v869
        %v959 = vadd.f32 %v809, %v872
        %v960 = vadd.f32 %v810, %v875
        %v961 = vadd.f32 %v811, %v878
        %v962 = vadd.f32 %v812, %v881
        %v963 = vadd.f32 %v813, %v884
        %v964 = vadd.f32 %v814, %v887
        %v965 = vadd.f32 %v815, %v890
        %v966 = vadd.f32 %v816, %v893
        %v967 = vadd.f32 %v817, %v896
        %v968 = vadd.f32 %v818, %v899
        %v969 = vadd.f32 %v819, %v902
        %v970 = vadd.f32 %v820, %v905
        %v971 = vadd.f32 %v821, %v908
        %v972 = vadd.f32 %v822, %v911
        %v973 = vadd.f32 %v823, %v914
        %v974 = vadd.f32 %v824, %v917
        %v975 = vadd.f32 %v825, %v920
        %v976 = vadd.f32 %v826, %v923
        %v977 = vadd.f32 %v827, %v926
        %v978 = vadd.f32 %v828, %v929
        %v979 = vadd.f32 %v829, %v932
        %v980 = vadd.f32 %v830, %v935
        %v981 = vadd.f32 %v831, %v938
        %v982 = vadd.f32 %v832, %v941
        %v983 = vadd.f32 %v833, %v944
        %v984 = vadd.f32 %v834, %v947
        %v985 = vadd.f32 %v835, %v950
        %v986 = vadd.f32 %v836, %v953
        %v987 = vld [vmem:[%s2] sm:$0x1]
        %v989 = vperm.slane %v987, 0
        %v991 = vadd.f32 %v955, %v989
        %v992 = vadd.f32 %v956, %v989
        %v993 = vadd.f32 %v957, %v989
        %v994 = vadd.f32 %v958, %v989
        %v995 = vadd.f32 %v959, %v989
        %v996 = vadd.f32 %v960, %v989
        %v997 = vadd.f32 %v961, %v989
        %v998 = vadd.f32 %v962, %v989
        %v999 = vadd.f32 %v963, %v989
        %v1000 = vadd.f32 %v964, %v989
        %v1001 = vadd.f32 %v965, %v989
        %v1002 = vadd.f32 %v966, %v989
        %v1003 = vadd.f32 %v967, %v989
        %v1004 = vadd.f32 %v968, %v989
        %v1005 = vadd.f32 %v969, %v989
        %v1006 = vadd.f32 %v970, %v989
        %v1007 = vadd.f32 %v971, %v989
        %v1008 = vadd.f32 %v972, %v989
        %v1009 = vadd.f32 %v973, %v989
        %v1010 = vadd.f32 %v974, %v989
        %v1011 = vadd.f32 %v975, %v989
        %v1012 = vadd.f32 %v976, %v989
        %v1013 = vadd.f32 %v977, %v989
        %v1014 = vadd.f32 %v978, %v989
        %v1015 = vadd.f32 %v979, %v989
        %v1016 = vadd.f32 %v980, %v989
        %v1017 = vadd.f32 %v981, %v989
        %v1018 = vadd.f32 %v982, %v989
        %v1019 = vadd.f32 %v983, %v989
        %v1020 = vadd.f32 %v984, %v989
        %v1021 = vadd.f32 %v985, %v989
        %v1022 = vadd.f32 %v986, %v989
        %1023 = vst [vmem:[%s163] sm:$0xff] %v991
        %1024 = vst [vmem:[%s163 + $0x8] sm:$0xff] %v992
        %1025 = vst [vmem:[%s163 + $0x10] sm:$0xff] %v993
        %1026 = vst [vmem:[%s163 + $0x18] sm:$0xff] %v994
        %1027 = vst [vmem:[%s163 + $0x20] sm:$0xff] %v995
        %1028 = vst [vmem:[%s163 + $0x28] sm:$0xff] %v996
        %1029 = vst [vmem:[%s163 + $0x30] sm:$0xff] %v997
        %1030 = vst [vmem:[%s163 + $0x38] sm:$0xff] %v998
        %1031 = vst [vmem:[%s163 + $0x40] sm:$0xff] %v999
        %1032 = vst [vmem:[%s163 + $0x48] sm:$0xff] %v1000
        %1033 = vst [vmem:[%s163 + $0x50] sm:$0xff] %v1001
        %1034 = vst [vmem:[%s163 + $0x58] sm:$0xff] %v1002
        %1035 = vst [vmem:[%s163 + $0x60] sm:$0xff] %v1003
        %1036 = vst [vmem:[%s163 + $0x68] sm:$0xff] %v1004
        %1037 = vst [vmem:[%s163 + $0x70] sm:$0xff] %v1005
        %1038 = vst [vmem:[%s163 + $0x78] sm:$0xff] %v1006
        %1039 = vst [vmem:[%s163 + $0x80] sm:$0xff] %v1007
        %1040 = vst [vmem:[%s163 + $0x88] sm:$0xff] %v1008
        %1041 = vst [vmem:[%s163 + $0x90] sm:$0xff] %v1009
        %1042 = vst [vmem:[%s163 + $0x98] sm:$0xff] %v1010
        %1043 = vst [vmem:[%s163 + $0xa0] sm:$0xff] %v1011
        %1044 = vst [vmem:[%s163 + $0xa8] sm:$0xff] %v1012
        %1045 = vst [vmem:[%s163 + $0xb0] sm:$0xff] %v1013
        %1046 = vst [vmem:[%s163 + $0xb8] sm:$0xff] %v1014
        %1047 = vst [vmem:[%s163 + $0xc0] sm:$0xff] %v1015
        %1048 = vst [vmem:[%s163 + $0xc8] sm:$0xff] %v1016
        %1049 = vst [vmem:[%s163 + $0xd0] sm:$0xff] %v1017
        %1050 = vst [vmem:[%s163 + $0xd8] sm:$0xff] %v1018
        %1051 = vst [vmem:[%s163 + $0xe0] sm:$0xff] %v1019
        %1052 = vst [vmem:[%s163 + $0xe8] sm:$0xff] %v1020
        %1053 = vst [vmem:[%s163 + $0xf0] sm:$0xff] %v1021
        %1054 = vst [vmem:[%s163 + $0xf8] sm:$0xff] %v1022
        %s1055 = sand.u32 %s93, 1
        %s1056 = scalar_lea.sflag [#allocation3], %s1055
        %s1057 = sand.u32 %s93, 1
        %s1058 = smul.addr %s1057, 256
        %s1059 = scalar_lea.vmem [#allocation2], %s1058
        // Predicated region
        $region33: #{tpu_custom_call.1} parent=31 // pred_check
          %p1060 = pneg %p103
        $region34: #{tpu_custom_call.1} parent=31 // pred_check_branch
          %1062 = sbr.rel (%p1060) target = $region36
        $region35: #{tpu_custom_call.1} parent=31 // pred_region
          %1064 = vsyncadd %s1056, 0
          %s1065 = smul.addr %s17, 32
          %s1066 = smul.addr %s1065, 8
          %s1067 = scalar_lea.hbm %s3, %s1066
          %s1068 = sshll.u32 %s1059, 4
          %s1069 = int_to_ptr.vmem [resolvable:$true] %s1068
          %s1070 = sshll.u32 %s1067, 4
          %s1071 = int_to_ptr.hbm [resolvable:$true] %s1070
          %1076 = dma.vmem_to_hbm [thread:$0]  %s1069, 4096, %s1071, %s1056, 128, 128, 8
        $region36: #{tpu_custom_call.1} parent=31 // pred_fallthru
          _
      $region32: #{tpu_custom_call.1} parent=5 // pred_fallthru
        _
      %p1077 = scmp.le.s32.totalorder 2, %s12
      // Predicated region
      $region37: #{tpu_custom_call.1} parent=5 // pred_check
        %p1078 = pneg %p1077
      $region38: #{tpu_custom_call.1} parent=5 // pred_check_branch
        %1080 = sbr.rel (%p1078) target = $region40
      $region39: #{tpu_custom_call.1} parent=5 // pred_region
        %s1081 = ssub.s32 %s12, 2
        // Predicated region
        $region41: #{tpu_custom_call.1} parent=39 // pred_check
          %p1082 = pneg %p109
        $region42: #{tpu_custom_call.1} parent=39 // pred_check_branch
          %1084 = sbr.rel (%p1082) target = $region44
        $region43: #{tpu_custom_call.1} parent=39 // pred_region
          %s1085 = sand.u32 %s94, 1
          %s1086 = scalar_lea.sflag [#allocation3], %s1085
          %s1087 = sand.u32 %s94, 1
          %s1088 = smul.addr %s1087, 256
          %s1089 = scalar_lea.vmem [#allocation2], %s1088
          %1091 = dma.done %s1086, 4096
        $region44: #{tpu_custom_call.1} parent=39 // pred_fallthru
          _
      $region40: #{tpu_custom_call.1} parent=5 // pred_fallthru
        _
    $region6: #{tpu_custom_call.1} parent=1 // loop_footer
      %s16 = sadd.s32 1, %s12
    $region7: #{tpu_custom_call.1} parent=1 // loop_footer_branch
      %11 = sbr.rel target = $region3
    $region8: #{tpu_custom_call.1} parent=1 // loop_exit
      _
    %1092 = vsyncpa [#allocation3], 1
    %s1093 = scalar_lea.sflag [#allocation3], 1
    %1094 = vsyncpa %s1093, 1

</llo_original>
